<compile_context>
chip_gen: v6e
topology: v6e:2x2x1
jax: 0.10.0
libtpu: 0.0.40
codegen_flags: <defaults>
</compile_context>

<pallas_src>
import functools

import jax
import jax.numpy as jnp
from jax import lax
from jax.experimental import pallas as pl
from jax.experimental.pallas import tpu as pltpu


# --------------------- generation-aware budgets / tiling -------------------- #

@functools.lru_cache(maxsize=None)
def _vmem_budget_bytes():
    """Scoped-VMEM budget: half of physical VMEM, capped at 64 MiB."""
    try:
        cap = int(pltpu.get_tpu_info().vmem_capacity_bytes)
    except Exception:
        cap = 64 * 1024 * 1024          # conservative (v7x-sized) fallback
    return min(cap // 2, 64 * 1024 * 1024)


def _matmul_tile_targets():
    # 128 MiB-VMEM parts (v5e/v6e): bigger tiles amortize the per-step overhead.
    if _vmem_budget_bytes() >= 64 * 1024 * 1024:
        return 512, 512, 512
    return 256, 256, 512                 # v7x-class (64 MiB VMEM) / unknown


def _pick_tile(dim, target, align):
    """Largest divisor of `dim` that is <= `target` and a multiple of `align`.

    Falls back to the full dimension (always a legal block shape) only when no
    aligned divisor exists.
    TODO(synk): pad + pl.cdiv grid with a masked epilogue for prime-ish dims.
    """
    if dim <= target:
        return dim
    t = (target // align) * align
    while t >= align:
        if dim % t == 0:
            return t
        t -= align
    return dim


# ------------------------- tiled projection matmul -------------------------- #

def _matmul_kernel(x_ref, w_ref, o_ref, acc_ref):
    @pl.when(pl.program_id(2) == 0)
    def _():
        acc_ref[...] = jnp.zeros_like(acc_ref)

    # Cast activations to bf16 inside VMEM (no separate XLA convert pass).
    acc_ref[...] += jnp.dot(x_ref[...].astype(jnp.bfloat16),
                            w_ref[...].astype(jnp.bfloat16),
                            preferred_element_type=jnp.float32)

    @pl.when(pl.program_id(2) == pl.num_programs(2) - 1)
    def _():
        o_ref[...] = acc_ref[...].astype(o_ref.dtype)


def matmul_pallas(x, w, *, out_dtype=jnp.float32):
    """[M, K] @ [K, N] -> [M, N]; tiled, double-buffered, bf16 MXU operands."""
    M, K = x.shape
    K2, N = w.shape
    assert K == K2
    tm_t, tn_t, tk_t = _matmul_tile_targets()
    tm = _pick_tile(M, tm_t, 16)          # sublane dim (16 covers bf16 inputs)
    tn = _pick_tile(N, tn_t, 128)         # lane dim
    tk = _pick_tile(K, tk_t, 128)
    return pl.pallas_call(
        _matmul_kernel,
        out_shape=jax.ShapeDtypeStruct((M, N), out_dtype),
        grid=(M // tm, N // tn, K // tk),
        in_specs=[
            pl.BlockSpec((tm, tk), lambda i, j, k: (i, k)),
            pl.BlockSpec((tk, tn), lambda i, j, k: (k, j)),
        ],
        out_specs=pl.BlockSpec((tm, tn), lambda i, j, k: (i, j)),
        scratch_shapes=[pltpu.VMEM((tm, tn), jnp.float32)],
        compiler_params=pltpu.CompilerParams(
            dimension_semantics=("parallel", "parallel", "arbitrary"),
            vmem_limit_bytes=_vmem_budget_bytes()),
    )(x, w)


# -------------------------- monotonic attention ----------------------------- #

def _softmax_last(x):
    m = jnp.max(x, axis=-1, keepdims=True)
    e = jnp.exp(x - m)
    return e * pl.reciprocal(jnp.sum(e, axis=-1, keepdims=True), approx=True)


def _make_attn_kernel(n_heads, dh, tq, seq_len, dk, mask_kind):
    scale = 1.0 / float(dk) ** 0.5

    def kernel(*refs):
        if mask_kind == "none":
            theta_ref, q_ref, k_ref, v_ref, o_ref = refs
            mask2d = None
        else:
            theta_ref, q_ref, k_ref, v_ref, m_ref, o_ref = refs
            mask2d = m_ref[...] if mask_kind == "shared" else m_ref[0]

        theta = theta_ref[0]                     # = -softplus(gamma), SMEM scalar
        q = q_ref[0]                             # [tq, H] bf16
        k = k_ref[0]                             # [S,  H] bf16
        v = v_ref[0]                             # [S,  H] bf16

        # Head-batched operands [n_heads, tq|S, dh] (one stack, no per-head dots).
        qh = jnp.stack([q[:, h * dh:(h + 1) * dh] for h in range(n_heads)], 0)
        kh = jnp.stack([k[:, h * dh:(h + 1) * dh] for h in range(n_heads)], 0)
        vh = jnp.stack([v[:, h * dh:(h + 1) * dh] for h in range(n_heads)], 0)

        # QK^T for all heads in one batched MXU call: [n_heads, tq, S] f32.
        w = jnp.einsum("hqd,hkd->hqk", qh, kh,
                       preferred_element_type=jnp.float32)

        if mask2d is not None:
            # Additive bias computed once per step (no per-head compare+select).
            bias = mask2d.astype(jnp.float32) * jnp.float32(-100000000.0)
            w = w + bias[None, :, :]

        w_n = w * scale

        # distance_func (f32).
        score = _softmax_last(w_n)

        # disttotal - distcum == suffix sum over kv; done as score @ tril on the
        # MXU (idle during this phase) instead of a VPU scan.
        rj = lax.broadcasted_iota(jnp.int32, (seq_len, seq_len), 0)
        cj = lax.broadcasted_iota(jnp.int32, (seq_len, seq_len), 1)
        strict_lower = (rj > cj).astype(jnp.float32)
        suffix = jnp.dot(score.reshape(n_heads * tq, seq_len), strict_lower,
                         preferred_element_type=jnp.float32
                         ).reshape(n_heads, tq, seq_len)

        # position effect |col - global_row|.
        q_start = pl.program_id(1) * tq
        ri = lax.broadcasted_iota(jnp.int32, (tq, seq_len), 0) + q_start
        cq = lax.broadcasted_iota(jnp.int32, (tq, seq_len), 1)
        pos = jnp.abs(cq - ri).astype(jnp.float32)

        dist = jnp.sqrt(jnp.maximum(suffix * pos[None, :, :], 0.0))
        total_effect = jnp.clip(jnp.exp(dist * theta), 1e-5, 1e5)

        # TODO(synk): attention-weight dropout (training) not applied; this
        #             matches the module in eval mode only.
        s = _softmax_last(w_n * total_effect)
        ctx = jnp.einsum("hqk,hkd->hqd", s.astype(vh.dtype), vh,
                         preferred_element_type=jnp.float32)

        # One lane-dense [tq, H] store; head h occupies cols [h*dh, (h+1)*dh),
        # identical to torch's split(dim=0) + cat(dim=-1) layout.
        o_ref[0] = jnp.concatenate([ctx[h] for h in range(n_heads)],
                                   axis=-1).astype(o_ref.dtype)

    return kernel


def _pick_tq(seq_len, n_heads, budget_bytes):
    # ~8 f32 [n_heads, tq, S] temporaries live at the peak, plus the [S, S]
    # triangular matrix; leave roughly half the budget for pipeline blocks.
    avail = budget_bytes // 2 - seq_len * seq_len * 4
    tq = max(avail // max(8 * n_heads * seq_len * 4, 1), 8)
    tq = min(tq, seq_len)
    # Align to 32 so bf16/int8 blocks stay tile-friendly (full dim is exempt).
    return _pick_tile(seq_len, tq, 32)


def monotonic_attention_pallas(theta, q, k, v, mask=None, *, n_heads, dk):
    """q, k, v: [B, S, H] (bf16); mask: None | [S, S] shared | [B, S, S]."""
    B, S, H = q.shape
    dh = H // n_heads
    budget = _vmem_budget_bytes()
    tq = _pick_tq(S, n_heads, budget)

    if mask is None:
        mask_kind, mask_args, mask_specs = "none", (), ()
    elif mask.ndim == 2:
        mask_kind = "shared"               # one [S, S] mask shared by every batch
        mask_args = (mask.astype(jnp.int8),)
        mask_specs = (pl.BlockSpec((tq, S), lambda b, qi: (qi, 0)),)
    else:
        mask_kind = "batched"
        mask_args = (mask.astype(jnp.int8),)
        mask_specs = (pl.BlockSpec((1, tq, S), lambda b, qi: (b, qi, 0)),)

    kernel = _make_attn_kernel(n_heads, dh, tq, S, dk, mask_kind)
    return pl.pallas_call(
        kernel,
        out_shape=jax.ShapeDtypeStruct((B, S, H), jnp.bfloat16),
        grid=(B, S // tq),
        in_specs=[
            pl.BlockSpec(memory_space=pltpu.MemorySpace.SMEM),   # theta (1,)
            pl.BlockSpec((1, tq, H), lambda b, qi: (b, qi, 0)),  # Q rows
            pl.BlockSpec((1, S, H), lambda b, qi: (b, 0, 0)),    # full K
            pl.BlockSpec((1, S, H), lambda b, qi: (b, 0, 0)),    # full V
            *mask_specs,
        ],
        out_specs=pl.BlockSpec((1, tq, H), lambda b, qi: (b, qi, 0)),
        compiler_params=pltpu.CompilerParams(
            dimension_semantics=("parallel", "parallel"),
            vmem_limit_bytes=budget),
    )(theta, q, k, v, *mask_args)


# ----------------------------- MultiHead forward ---------------------------- #

def init_params(key, hidden_size, n_splits):
    k1, k2, k3, k4, k5 = jax.random.split(key, 5)
    bound = 1.0 / (hidden_size ** 0.5)

    def lin(k):
        # Stored pre-transposed as [in, out] so the forward never pays a W.T.
        return jax.random.uniform(k, (hidden_size, hidden_size),
                                  jnp.float32, -bound, bound)

    Wq, Wk, Wv, Wo = lin(k1), lin(k2), lin(k3), lin(k4)
    # gamma: (1, 1) xavier_uniform -> U(-sqrt(3), sqrt(3))
    gamma = jax.random.uniform(k5, (1, 1), jnp.float32,
                               -(3.0 ** 0.5), 3.0 ** 0.5)
    return {
        # f32 master copies (used by the pure-JAX reference).
        "Wq": Wq, "Wk": Wk, "Wv": Wv, "Wo": Wo, "gamma": gamma,
        # bf16 copies pre-cast ONCE for the kernel path (no per-call convert).
        "Wq_bf16": Wq.astype(jnp.bfloat16), "Wk_bf16": Wk.astype(jnp.bfloat16),
        "Wv_bf16": Wv.astype(jnp.bfloat16), "Wo_bf16": Wo.astype(jnp.bfloat16),
        "n_splits": n_splits, "hidden_size": hidden_size,
    }


def multi_head_forward(params, Q, K, V, mask=None):
    B, S, H = Q.shape
    n_splits = params["n_splits"]
    dh = H // n_splits

    # Projections: activations in native dtype (cast to bf16 in-kernel),
    # pre-cast bf16 weights, bf16 outputs feeding the attention kernel.
    QW = matmul_pallas(Q.reshape(B * S, H), params["Wq_bf16"],
                       out_dtype=jnp.bfloat16).reshape(B, S, H)
    KW = matmul_pallas(K.reshape(B * S, H), params["Wk_bf16"],
                       out_dtype=jnp.bfloat16).reshape(B, S, H)
    VW = matmul_pallas(V.reshape(B * S, H), params["Wv_bf16"],
                       out_dtype=jnp.bfloat16).reshape(B, S, H)

    theta = (-jax.nn.softplus(params["gamma"])).reshape(1).astype(jnp.float32)

    c = monotonic_attention_pallas(theta, QW, KW, VW, mask,
                                   n_heads=n_splits, dk=dh)     # [B,S,H] bf16

    out = matmul_pallas(c.reshape(B * S, H), params["Wo_bf16"],
                        out_dtype=jnp.float32)
    return out.reshape(B, S, H)


# ----------------------------- Pure-JAX reference --------------------------- #

def multi_head_reference(params, Q, K, V, mask=None):
    B, S, H = Q.shape
    n = params["n_splits"]
    dh = H // n

    QW, KW, VW = Q @ params["Wq"], K @ params["Wk"], V @ params["Wv"]

    def split_heads(x):
        return (x.reshape(B, S, n, dh).transpose(2, 0, 1, 3).reshape(n * B, S, dh))

    q, k, v = split_heads(QW), split_heads(KW), split_heads(VW)
    w = jnp.einsum("bsd,btd->bst", q, k)
    if mask is not None:
        m = mask if mask.ndim == 3 else jnp.broadcast_to(mask, (B, S, S))
        w = jnp.where(jnp.tile(m, (n, 1, 1)), -100000000.0, w)
    w_n = w / (dh ** 0.5)
    score = jax.nn.softmax(w_n, axis=-1)
    idx = jnp.arange(S, dtype=jnp.float32)
    pos = jnp.abs(idx[None, :] - idx[:, None])[None]
    distcum = jnp.cumsum(score, axis=-1)
    disttotal = jnp.sum(score, axis=-1, keepdims=True)
    dist = jnp.sqrt(jnp.maximum((disttotal - distcum) * pos, 0.0))
    theta = -jax.nn.softplus(params["gamma"][0, 0])
    total_effect = jnp.clip(jnp.exp(dist * theta), 1e-5, 1e5)
    s = jax.nn.softmax(w_n * total_effect, axis=-1)
    c = jnp.einsum("bst,btd->bsd", s, v)
    c = c.reshape(n, B, S, dh).transpose(1, 2, 0, 3).reshape(B, S, H)
    return c @ params["Wo"]


# ----------------------------------- main ----------------------------------- #

if __name__ == "__main__":
    B, S, H, n_splits = 2, 8, 32, 4

    key = jax.random.PRNGKey(0)
    kp, kx = jax.random.split(key)
    params = init_params(kp, H, n_splits)

    # Self-attention input, as used in the BERT4KT encoder.
    x = jax.random.normal(kx, (B, S, H), jnp.float32)
    # Causal mask shared across the batch: True where attention is disallowed.
    causal = jnp.triu(jnp.ones((S, S), jnp.bool_), k=1)

    out = multi_head_forward(params, x, x, x, mask=causal)
    out = jax.block_until_ready(out)
    assert out.shape == (B, S, H)

    ref = multi_head_reference(params, x, x, x, mask=causal)
    max_err = float(jnp.max(jnp.abs(out - ref)))
    # bf16 MXU operands / bf16 attention output vs. the f32 reference.
    assert jnp.allclose(out, ref, atol=5e-2, rtol=5e-2), (
        f"mismatch vs reference (max abs err {max_err:.4f})")

    print("KERNEL_OK")
</pallas_src>

<mosaic_0001>
module attributes {stable_mosaic.version = 11 : i64} {
  func.func @_matmul_kernel(%arg0: i32, %arg1: i32, %arg2: i32, %arg3: memref<16x32xf32, #tpu.memory_space<vmem>>, %arg4: memref<32x32xbf16, #tpu.memory_space<vmem>>, %arg5: memref<16x32xbf16, #tpu.memory_space<vmem>>, %arg6: memref<16x32xf32, #tpu.memory_space<vmem>>) attributes {dimension_semantics = [#tpu.dimension_semantics<parallel>, #tpu.dimension_semantics<parallel>, #tpu.dimension_semantics<arbitrary>], iteration_bounds = array<i64: 1, 1, 1>, scalar_prefetch = 0 : i64, scratch_operands = 1 : i64, tpu.core_type = #tpu.core_type<tc>, window_params = [{transform_indices = @transform_0, window_bounds = array<i64: 16, 32>}, {transform_indices = @transform_1, window_bounds = array<i64: 32, 32>}, {transform_indices = @transform_2, window_bounds = array<i64: 16, 32>}]} {
    %c0_i32 = arith.constant 0 : i32
    %0 = arith.cmpi eq, %arg2, %c0_i32 : i32
    %1 = arith.extui %0 : i1 to i32
    %c0_i32_0 = arith.constant 0 : i32
    %2 = arith.cmpi ne, %1, %c0_i32_0 : i32
    scf.if %2 {
      %cst_10 = arith.constant 0.000000e+00 : f32
      %13 = vector.broadcast %cst_10 : f32 to vector<16x32xf32>
      %c0_11 = arith.constant 0 : index
      %c0_12 = arith.constant 0 : index
      %14 = vector.load %arg6[%c0_11, %c0_12] : memref<16x32xf32, #tpu.memory_space<vmem>>, vector<16x32xf32>
      tpu.vector_store %arg6[%c0_11, %c0_12], %13 {strides = array<i32>} : memref<16x32xf32, #tpu.memory_space<vmem>>, vector<16x32xf32>,
    } else {
    }
    %c0 = arith.constant 0 : index
    %c0_1 = arith.constant 0 : index
    %3 = vector.load %arg6[%c0, %c0_1] : memref<16x32xf32, #tpu.memory_space<vmem>>, vector<16x32xf32>
    %c0_2 = arith.constant 0 : index
    %c0_3 = arith.constant 0 : index
    %4 = vector.load %arg3[%c0_2, %c0_3] : memref<16x32xf32, #tpu.memory_space<vmem>>, vector<16x32xf32>
    %5 = arith.truncf %4 : vector<16x32xf32> to vector<16x32xbf16>
    %c0_4 = arith.constant 0 : index
    %c0_5 = arith.constant 0 : index
    %6 = vector.load %arg4[%c0_4, %c0_5] : memref<32x32xbf16, #tpu.memory_space<vmem>>, vector<32x32xbf16>
    %cst = arith.constant dense<0.000000e+00> : vector<16x32xf32>
    %7 = tpu.matmul %5, %6, %cst {dimension_numbers = #tpu.dot_dimension_numbers<[1], [0], [0], [1], [0, 0, 1, 1], [], []>} : vector<16x32xbf16>, vector<32x32xbf16>, vector<16x32xf32> -> vector<16x32xf32>
    %8 = arith.addf %3, %7 : vector<16x32xf32>
    %c0_6 = arith.constant 0 : index
    %c0_7 = arith.constant 0 : index
    %9 = vector.load %arg6[%c0_6, %c0_7] : memref<16x32xf32, #tpu.memory_space<vmem>>, vector<16x32xf32>
    tpu.vector_store %arg6[%c0_6, %c0_7], %8 {strides = array<i32>} : memref<16x32xf32, #tpu.memory_space<vmem>>, vector<16x32xf32>,
    %c0_i32_8 = arith.constant 0 : i32
    %10 = arith.cmpi eq, %arg2, %c0_i32_8 : i32
    %11 = arith.extui %10 : i1 to i32
    %c0_i32_9 = arith.constant 0 : i32
    %12 = arith.cmpi ne, %11, %c0_i32_9 : i32
    scf.if %12 {
      %c0_10 = arith.constant 0 : index
      %c0_11 = arith.constant 0 : index
      %13 = vector.load %arg6[%c0_10, %c0_11] : memref<16x32xf32, #tpu.memory_space<vmem>>, vector<16x32xf32>
      %14 = arith.truncf %13 : vector<16x32xf32> to vector<16x32xbf16>
      %c0_12 = arith.constant 0 : index
      %c0_13 = arith.constant 0 : index
      %15 = vector.load %arg5[%c0_12, %c0_13] : memref<16x32xbf16, #tpu.memory_space<vmem>>, vector<16x32xbf16>
      tpu.vector_store %arg5[%c0_12, %c0_13], %14 {strides = array<i32>} : memref<16x32xbf16, #tpu.memory_space<vmem>>, vector<16x32xbf16>,
    } else {
    }
    return
  }
  func.func @transform_0(%arg0: i32, %arg1: i32, %arg2: i32) -> (i32, i32) {
    %c0_i32 = arith.constant 0 : i32
    return %arg0, %arg2 : i32, i32
  }
  func.func @transform_1(%arg0: i32, %arg1: i32, %arg2: i32) -> (i32, i32) {
    %c0_i32 = arith.constant 0 : i32
    return %arg2, %arg1 : i32, i32
  }
  func.func @transform_2(%arg0: i32, %arg1: i32, %arg2: i32) -> (i32, i32) {
    %c0_i32 = arith.constant 0 : i32
    return %arg0, %arg1 : i32, i32
  }
}

</mosaic_0001>

<llo_original>
// kernel: tpu_custom_call.1
$region0: #{tpu_custom_call.1}
  #allocation0 [shape = 'u32[]', space=smem, size = 0x4, offset = 0x4, fixed_abs, tag = 'smem constant byte address 0x4 - core index']
  #allocation1 [shape = 'u32[144,128]{1,0:T(1,128)}', space=vmem, size = 0x12000, scoped, tag = 'internal scratch']
  #allocation2 [shape = 'f32[16,32]{1,0:T(8,128)}', space=vmem, size = 0x2000, scoped, tag = 'scratch operand']
  %s0 = inlined_call_operand.hbm [shape: f32[16,32], index: 0, kind: input, shape index: {}]
  %s1 = inlined_call_operand.hbm [shape: bf16[32,32], index: 1, kind: input, shape index: {}]
  %s2 = inlined_call_operand.hbm [shape: bf16[16,32], index: 2, kind: output, shape index: {}]
  %s3 = sld [smem:[#allocation0]]
  $region34: #{tpu_custom_call.1} parent=0
    _
  %s5 = ssub.s32 1, %s3
  %s6 = scalar_select 0, %s5, %s3
  $region1: #{tpu_custom_call.1} parent=0
    #allocation3 [shape = 'u8[8192]{0}', space=vmem, size = 0x2000, scoped, tag = 'input window, operand 0, single buffered']
    #allocation4 [shape = 's32[1]{0}', space=sflag, size = 0x4, scoped, tag = 'scoped memory for tpu_custom_call.1']
    #allocation5 [shape = 's32[1]{0}', space=sflag, size = 0x4, scoped, tag = 'scoped memory for tpu_custom_call.1']
    #allocation6 [shape = 'u8[8192]{0}', space=vmem, size = 0x2000, scoped, tag = 'input window, operand 1, single buffered']
    #allocation7 [shape = 's32[1]{0}', space=sflag, size = 0x4, scoped, tag = 'scoped memory for tpu_custom_call.1']
    #allocation8 [shape = 'u8[4096]{0}', space=vmem, size = 0x1000, scoped, tag = 'output window, operand 0, single buffered']
    %7 = vsyncpa [#allocation4], 0
    %8 = vsyncpa [#allocation7], 0
    %9 = vsyncpa [#allocation5], 0
    // Predicated region
    $region2: #{tpu_custom_call.1} parent=1 // pred_check
      _
    $region3: #{tpu_custom_call.1} parent=1 // pred_check_branch
      %11 = sbr.rel (0) target = $region5
    $region4: #{tpu_custom_call.1} parent=1 // pred_region
      %s13 = ssub.s32 256, 256
      %14 = vsyncadd [#allocation4], %s13
      %s15 = sshll.u32 [#allocation3], 4
      %s16 = int_to_ptr.vmem [resolvable:$true] %s15
      %21 = dma.hbm_to_vmem [thread:$0]  %s0, 256, %s16, [#allocation4], 128, 128, 8
    $region5: #{tpu_custom_call.1} parent=1 // pred_fallthru
      _
    // Predicated region
    $region6: #{tpu_custom_call.1} parent=1 // pred_check
      _
    $region7: #{tpu_custom_call.1} parent=1 // pred_check_branch
      %23 = sbr.rel (0) target = $region9
    $region8: #{tpu_custom_call.1} parent=1 // pred_region
      %s25 = ssub.s32 256, 256
      %26 = vsyncadd [#allocation7], %s25
      %s27 = sshll.u32 [#allocation6], 4
      %s28 = int_to_ptr.vmem [resolvable:$true] %s27
      %33 = dma.hbm_to_vmem [thread:$0]  %s1, 256, %s28, [#allocation7], 64, 64, 4
    $region9: #{tpu_custom_call.1} parent=1 // pred_fallthru
      _
    // Predicated region
    $region10: #{tpu_custom_call.1} parent=1 // pred_check
      _
    $region11: #{tpu_custom_call.1} parent=1 // pred_check_branch
      %35 = sbr.rel (0) target = $region13
    $region12: #{tpu_custom_call.1} parent=1 // pred_region
      %36 = dma.done [#allocation4], 256
    $region13: #{tpu_custom_call.1} parent=1 // pred_fallthru
      _
    // Predicated region
    $region14: #{tpu_custom_call.1} parent=1 // pred_check
      _
    $region15: #{tpu_custom_call.1} parent=1 // pred_check_branch
      %38 = sbr.rel (0) target = $region17
    $region16: #{tpu_custom_call.1} parent=1 // pred_region
      %39 = dma.done [#allocation7], 256
    $region17: #{tpu_custom_call.1} parent=1 // pred_fallthru
      _
    %p41 = scmp.eq.s32.totalorder 0, 0
    // Predicated region
    $region18: #{tpu_custom_call.1} parent=1 // pred_check
      %p42 = pneg %p41
    $region19: #{tpu_custom_call.1} parent=1 // pred_check_branch
      %44 = sbr.rel (%p42) target = $region21
    $region20: #{tpu_custom_call.1} parent=1 // pred_region
      %vm45 = vcmask 261120
      %46 = vst.msk [vmem:[#allocation2] sm:$0xff] %vm45, 0.0
      %47 = vst.msk [vmem:[#allocation2 + $0x8] sm:$0xff] %vm45, 0.0
    $region21: #{tpu_custom_call.1} parent=1 // pred_fallthru
      _
    %v48 = vld [vmem:[#allocation2] sm:$0xff]
    %v49 = vld [vmem:[#allocation2 + $0x8] sm:$0xff]
    %v50 = vld [vmem:[#allocation3] sm:$0xff]
    %v51 = vld [vmem:[#allocation3 + $0x8] sm:$0xff]
    %v52 = vpack.c.bf16 %v51, %v50
    %v53 = vld [vmem:[#allocation6] sm:$0xf]
    %v54 = vld [vmem:[#allocation6 + $0x4] sm:$0xf]
    %v55 = vld [vmem:[#allocation6 + $0x8] sm:$0xf]
    %v56 = vld [vmem:[#allocation6 + $0xc] sm:$0xf]
    %v61 = vunpack.c.l.b16 %v53
    %v62 = vunpack.c.l.b16 %v54
    %v63 = vunpack.c.l.b16 %v55
    %v64 = vunpack.c.l.b16 %v56
    %v65 = vpack.c.b16 %v62, %v61
    %v66 = vpack.c.b16 %v64, %v63
    %vm69 = vcmask 261120
    %v71 = vsel %vm69, %v52, 0
    %73 = vmatprep.subr.bf16.mxu0 0
    %74 = vmatpush1.bf16.msra.mxu0 0
    %75 = vmatprep.subr.bf16.mxu0 0
    %76 = vmatpush1.bf16.msra.mxu0 0
    %77 = vmatprep.subr.bf16.mxu0 0
    %78 = vmatpush1.bf16.msra.mxu0 0
    %79 = vmatprep.subr.bf16.mxu0 0
    %80 = vmatpush1.bf16.msra.mxu0 0
    %81 = vmatprep.subr.bf16.mxu0 0
    %82 = vmatpush1.bf16.msra.mxu0 0
    %83 = vmatprep.subr.bf16.mxu0 0
    %84 = vmatpush1.bf16.msra.mxu0 0
    %85 = vmatprep.subr.bf16.mxu0 0
    %86 = vmatpush1.bf16.msra.mxu0 %v66
    %87 = vmatprep.subr.bf16.mxu0 0
    %88 = vmatpush1.bf16.msra.mxu0 %v65
    %89 = vmatprep.subr.bf16.mxu0 0
    %90 = vmatpush2.bf16.msra.mxu0 0
    %91 = vmatprep.subr.bf16.mxu0 0
    %92 = vmatpush2.bf16.msra.mxu0 0
    %93 = vmatprep.subr.bf16.mxu0 0
    %94 = vmatpush2.bf16.msra.mxu0 0
    %95 = vmatprep.subr.bf16.mxu0 0
    %96 = vmatpush2.bf16.msra.mxu0 0
    %97 = vmatprep.subr.bf16.mxu0 0
    %98 = vmatpush2.bf16.msra.mxu0 0
    %99 = vmatprep.subr.bf16.mxu0 0
    %100 = vmatpush2.bf16.msra.mxu0 0
    %101 = vmatprep.subr.bf16.mxu0 0
    %102 = vmatpush2.bf16.msra.mxu0 0
    %103 = vmatprep.subr.bf16.mxu0 0
    %104 = vmatpush2.bf16.msra.mxu0 0
    %105 = vmatprep.mubr.bf16.mxu0 0
    %106 = vmatmul.mubr.bf16.gmra.mxu0 %v71
    %v107 = vpop.f32.mrf.mxu0
    %v108 = vadd.f32 0.0, %v107
    %v109 = vpop.f32.mrf.mxu0
    %v110 = vpop.f32.mrf.mxu0
    %v111 = vadd.f32 0.0, %v110
    %v112 = vpop.f32.mrf.mxu0
    %113 = vdwg.mxu0
    %v114 = vadd.f32 %v48, %v108
    %v115 = vadd.f32 %v49, %v111
    %116 = vst.msk [vmem:[#allocation2] sm:$0xff] %vm69, %v114
    %117 = vst.msk [vmem:[#allocation2 + $0x8] sm:$0xff] %vm69, %v115
    // Predicated region
    $region22: #{tpu_custom_call.1} parent=1 // pred_check
      %p118 = pneg %p41
    $region23: #{tpu_custom_call.1} parent=1 // pred_check_branch
      %120 = sbr.rel (%p118) target = $region25
    $region24: #{tpu_custom_call.1} parent=1 // pred_region
      %v121 = vld [vmem:[#allocation2] sm:$0xff]
      %v122 = vld [vmem:[#allocation2 + $0x8] sm:$0xff]
      %v123 = vpack.c.bf16 %v122, %v121
      %v125 = vunpack.c.l.b16 %v123
      %v126 = vunpack.c.h.b16 %v123
      %v127 = vpack.c.b16 %v125, %v125
      %v128 = vpack.c.b16 %v126, %v126
      %vm131 = vcmask 257024
      %132 = vst.msk [vmem:[#allocation8] sm:$0xf] %vm131, %v127
      %133 = vst.msk [vmem:[#allocation8 + $0x4] sm:$0xf] %vm131, %v128
    $region25: #{tpu_custom_call.1} parent=1 // pred_fallthru
      _
    // Predicated region
    $region26: #{tpu_custom_call.1} parent=1 // pred_check
      _
    $region27: #{tpu_custom_call.1} parent=1 // pred_check_branch
      %135 = sbr.rel (0) target = $region29
    $region28: #{tpu_custom_call.1} parent=1 // pred_region
      %s137 = ssub.s32 128, 128
      %138 = vsyncadd [#allocation5], %s137
      %s139 = sshll.u32 [#allocation8], 4
      %s140 = int_to_ptr.vmem [resolvable:$true] %s139
      %145 = dma.vmem_to_hbm [thread:$0]  %s140, 128, %s2, [#allocation5], 64, 64, 4
    $region29: #{tpu_custom_call.1} parent=1 // pred_fallthru
      _
    // Predicated region
    $region30: #{tpu_custom_call.1} parent=1 // pred_check
      _
    $region31: #{tpu_custom_call.1} parent=1 // pred_check_branch
      %147 = sbr.rel (0) target = $region33
    $region32: #{tpu_custom_call.1} parent=1 // pred_region
      %148 = dma.done [#allocation5], 128
    $region33: #{tpu_custom_call.1} parent=1 // pred_fallthru
      _
    %149 = vsyncpa [#allocation4], 1
    %150 = vsyncpa [#allocation7], 1
    %151 = vsyncpa [#allocation5], 1

</llo_original>
